<compile_context>
chip_gen: v5e
topology: v5e:2x2
jax: 0.10.0
libtpu: 0.0.40
codegen_flags: <defaults>
</compile_context>

<pallas_src>
import functools

import jax
import jax.numpy as jnp
from jax.experimental import pallas as pl
from jax.experimental.pallas import tpu as pltpu


# ---------------------------------------------------------------------------
# Kernels
# ---------------------------------------------------------------------------
def _peg_kernel_recompute(ep_ref, a_ref, ei_ref, ejT_ref, sqi_ref, sqj_ref,
                          h_ref, b_ref, o_ref, *, bf16_vpu):
    """o(i) = bias + sum_k (A(i,k) * gate(i,k)) @ h(k); distance recomputed."""
    k = pl.program_id(1)

    @pl.when(k == 0)
    def _():
        o_ref[...] = jnp.broadcast_to(b_ref[...], o_ref.shape)

    # Pairwise distances: ||a-b||^2 = ||a||^2 + ||b||^2 - 2 a.b
    # ejT is lane-dense (P, TK); cross term is a plain (TM,P)@(P,TK) MXU matmul.
    cross = jnp.dot(ei_ref[...], ejT_ref[...],
                    preferred_element_type=jnp.float32)              # (TM, TK)
    d2 = jnp.maximum(sqi_ref[...] + sqj_ref[...] - 2.0 * cross, 0.0)
    dist = jnp.sqrt(d2)                                              # (TM, TK)

    # Edge gate sigmoid(w_e*dist + b_e) in tanh form: one EUP op per element.
    we = ep_ref[0, 0]
    be = ep_ref[0, 1]
    gate = 0.5 * (1.0 + jnp.tanh(0.5 * (we * dist + be)))            # f32

    if bf16_vpu:
        gated = a_ref[...] * gate.astype(jnp.bfloat16)               # bf16 VPU
    else:  # v5e: no bf16 VALU -> f32 math, single cast before the MXU
        gated = (a_ref[...].astype(jnp.float32) * gate).astype(jnp.bfloat16)

    # bf16 x bf16 -> f32 aggregation on the MXU, accumulated in the resident
    # f32 output block.
    o_ref[...] += jnp.dot(gated, h_ref[...],
                          preferred_element_type=jnp.float32)


def _peg_kernel_dist(ep_ref, a_ref, d_ref, h_ref, b_ref, o_ref, *, bf16_vpu):
    """Same layer, but streams a precomputed bf16 distance tile (no sqrt)."""
    k = pl.program_id(1)

    @pl.when(k == 0)
    def _():
        o_ref[...] = jnp.broadcast_to(b_ref[...], o_ref.shape)

    we = ep_ref[0, 0]
    be = ep_ref[0, 1]
    dist = d_ref[...].astype(jnp.float32)
    gate = 0.5 * (1.0 + jnp.tanh(0.5 * (we * dist + be)))            # 1 EUP op

    if bf16_vpu:
        gated = a_ref[...] * gate.astype(jnp.bfloat16)
    else:
        gated = (a_ref[...].astype(jnp.float32) * gate).astype(jnp.bfloat16)

    o_ref[...] += jnp.dot(gated, h_ref[...],
                          preferred_element_type=jnp.float32)


# ---------------------------------------------------------------------------
# Wrapper
# ---------------------------------------------------------------------------
def _tpu_config():
    """Generation-specific dispatch (safe defaults if detection fails)."""
    kind = ""
    try:
        kind = jax.devices()[0].device_kind.lower()
    except Exception:
        pass
    if "v5" in kind:
        # HBM-bound: keep in-kernel distance recompute (single N^2 stream),
        # no bf16 VPU, single core -> big tiles.
        # TODO(synk): if the adj DMA is still exposed, add
        # pipeline_mode=pl.Buffered(3) on the adj BlockSpec (needs measurement).
        return dict(precompute_dist=False, bf16_vpu=False, two_core=False,
                    tm_max=1024, tk_max=1024, vmem_limit=96 << 20)
    if "v6" in kind:
        return dict(precompute_dist=False, bf16_vpu=True, two_core=False,
                    tm_max=1024, tk_max=1024, vmem_limit=96 << 20)
    # v7x (and unknown): EUP-bound + HBM-rich -> stream precomputed distances;
    # 2 TensorCores -> keep >=2 parallel row blocks; 64 MiB VMEM -> tiles <=512.
    return dict(precompute_dist=True, bf16_vpu=True, two_core=True,
                tm_max=512, tk_max=512, vmem_limit=None)


def _pick_tile(n, cap):
    for t in (1024, 512, 256, 128, 64, 32, 16):
        if t <= cap and n % t == 0:
            return t
    return n


def peg_conv(h_bf16, adj_bf16, bias, edge_params, cfg, *,
             emb=None, embT=None, sqn_row=None, sqn_col=None, dist_bf16=None):
    """Single PEGconv layer as a fused Pallas kernel (h = x @ W precomputed)."""
    n = adj_bf16.shape[0]
    cout = h_bf16.shape[1]

    tm_cap = cfg["tm_max"]
    if cfg["two_core"]:
        # Keep >=2 row blocks so both v7x TensorCores get "parallel" work.
        tm_cap = min(tm_cap, max(64, n // 2))
    tm = _pick_tile(n, tm_cap)
    tk = _pick_tile(n, cfg["tk_max"])
    grid = (n // tm, n // tk)

    cp_kwargs = dict(dimension_semantics=("parallel", "arbitrary"))
    if cfg["vmem_limit"] is not None:
        cp_kwargs["vmem_limit_bytes"] = cfg["vmem_limit"]
    compiler_params = pltpu.CompilerParams(**cp_kwargs)

    smem_spec = pl.BlockSpec((1, 2), lambda i, k: (0, 0),
                             memory_space=pltpu.MemorySpace.SMEM)   # [w_e, b_e]
    adj_spec = pl.BlockSpec((tm, tk), lambda i, k: (i, k))          # adj (bf16)
    h_spec = pl.BlockSpec((tk, cout), lambda i, k: (k, 0))          # h (bf16)
    b_spec = pl.BlockSpec((1, cout), lambda i, k: (0, 0))           # layer bias
    out_spec = pl.BlockSpec((tm, cout), lambda i, k: (i, 0))        # f32 acc

    if cfg["precompute_dist"]:
        kernel = functools.partial(_peg_kernel_dist, bf16_vpu=cfg["bf16_vpu"])
        in_specs = [
            smem_spec,
            adj_spec,
            pl.BlockSpec((tm, tk), lambda i, k: (i, k)),            # dist (bf16)
            h_spec,
            b_spec,
        ]
        operands = (edge_params, adj_bf16, dist_bf16, h_bf16, bias)
        cost = pl.CostEstimate(
            flops=int(2 * n * n * cout + 6 * n * n),
            transcendentals=int(n * n),
            bytes_accessed=int(4 * n * n + 2 * n * cout + 4 * n * cout))
    else:
        p = emb.shape[1]
        kernel = functools.partial(_peg_kernel_recompute,
                                   bf16_vpu=cfg["bf16_vpu"])
        in_specs = [
            smem_spec,
            adj_spec,
            pl.BlockSpec((tm, p), lambda i, k: (i, 0)),             # emb rows
            pl.BlockSpec((p, tk), lambda i, k: (0, k)),             # emb.T cols
            pl.BlockSpec((tm, 1), lambda i, k: (i, 0)),             # ||p_i||^2
            pl.BlockSpec((1, tk), lambda i, k: (0, k)),             # ||p_j||^2
            h_spec,
            b_spec,
        ]
        operands = (edge_params, adj_bf16, emb, embT, sqn_row, sqn_col,
                    h_bf16, bias)
        cost = pl.CostEstimate(
            flops=int(2 * n * n * (p + cout) + 8 * n * n),
            transcendentals=int(2 * n * n),
            bytes_accessed=int(2 * n * n
                               + (n // tm) * (4 * p * n + 2 * n * cout)
                               + 4 * n * (p + 1 + cout)))

    return pl.pallas_call(
        kernel,
        out_shape=jax.ShapeDtypeStruct((n, cout), jnp.float32),
        grid_spec=pltpu.PrefetchScalarGridSpec(
            num_scalar_prefetch=0,
            grid=grid,
            in_specs=in_specs,
            out_specs=out_spec,
        ),
        compiler_params=compiler_params,
        cost_estimate=cost,
    )(*operands)


# ---------------------------------------------------------------------------
# Model
# ---------------------------------------------------------------------------
def init_peg_params(key, in_channels, hidden_channels, out_channels, num_layers):
    """Deterministic parameter init mirroring PEG.__init__ layer shapes."""
    sizes = [(in_channels, hidden_channels)]
    sizes += [(hidden_channels, hidden_channels)] * (num_layers - 2)
    sizes += [(hidden_channels, out_channels)]
    params = []
    for cin, cout in sizes:
        key, k1, k2, k3, k4 = jax.random.split(key, 5)
        limit = (6.0 / (cin + cout)) ** 0.5                      # glorot uniform
        w = jax.random.uniform(k1, (cin, cout), jnp.float32, -limit, limit)
        b = jax.random.uniform(k4, (1, cout), jnp.float32, -0.1, 0.1)
        ew = jax.random.uniform(k2, (), jnp.float32, -1.0, 1.0)  # edge Linear(1,1)
        eb = jax.random.uniform(k3, (), jnp.float32, -1.0, 1.0)
        params.append((w, b, jnp.stack([ew, eb]).reshape(1, 2)))
    return params


def peg_forward(params, x, adj, emb, cfg=None):
    # Matches PEG.forward: plain chaining of PEGconv layers (dropout is unused
    # in the reference forward, so it is a no-op here).
    if cfg is None:
        cfg = _tpu_config()
    n = x.shape[0]
    n_pad = max(128, ((n + 127) // 128) * 128)
    pad = n_pad - n
    if pad:
        x = jnp.pad(x, ((0, pad), (0, 0)))
        emb = jnp.pad(emb, ((0, pad), (0, 0)))
        adj = jnp.pad(adj, ((0, pad), (0, pad)))

    # Dominant N^2 HBM stream stored as bf16; f32 accumulation in the kernel.
    adj_bf16 = adj.astype(jnp.bfloat16)
    sqn = jnp.sum(emb * emb, axis=-1)      # hoisted per-node squared norms

    extras = {}
    if cfg["precompute_dist"]:
        d2 = sqn[:, None] + sqn[None, :] - 2.0 * (emb @ emb.T)
        extras["dist_bf16"] = jnp.sqrt(jnp.maximum(d2, 0.0)).astype(jnp.bfloat16)
    else:
        extras["emb"] = emb                # (N, P) rows
        extras["embT"] = emb.T             # (P, N) lane-dense per-k operand
        extras["sqn_row"] = sqn[:, None]   # (N, 1)
        extras["sqn_col"] = sqn[None, :]   # (1, N)

    for w, b, ep in params:
        h = (x @ w).astype(jnp.bfloat16)   # bf16 feed for the MXU aggregation
        x = peg_conv(h, adj_bf16, b, ep, cfg, **extras)
    return x[:n]


def peg_forward_ref(params, x, adj, emb, cfg):
    """Pure-JAX reference mirroring the kernel's quantization choices."""
    adjq = adj.astype(jnp.bfloat16)
    sqn = jnp.sum(emb * emb, axis=-1)
    d = jnp.sqrt(jnp.maximum(
        sqn[:, None] + sqn[None, :] - 2.0 * (emb @ emb.T), 0.0))
    if cfg["precompute_dist"]:
        d = d.astype(jnp.bfloat16).astype(jnp.float32)
    for w, b, ep in params:
        gate = 0.5 * (1.0 + jnp.tanh(0.5 * (ep[0, 0] * d + ep[0, 1])))
        if cfg["bf16_vpu"]:
            gated = adjq * gate.astype(jnp.bfloat16)
        else:
            gated = (adjq.astype(jnp.float32) * gate).astype(jnp.bfloat16)
        h = (x @ w).astype(jnp.bfloat16)
        x = jnp.dot(gated, h, preferred_element_type=jnp.float32) + b
    return x


if __name__ == "__main__":
    key = jax.random.PRNGKey(0)

    N, P = 256, 8                          # nodes, positional-embedding dim
    in_channels, hidden_channels, out_channels = 16, 32, 8
    num_layers, dropout = 3, 0.5           # dropout unused in PEG.forward

    key, kx, ke, ka, kp = jax.random.split(key, 5)
    x = jax.random.normal(kx, (N, in_channels), jnp.float32)
    emb = jax.random.normal(ke, (N, P), jnp.float32)

    # Random symmetric graph -> dense GCN-normalized adjacency with self loops
    # (plays the role of the cached normalized adj_t SparseTensor).
    upper = (jax.random.uniform(ka, (N, N)) < 0.05).astype(jnp.float32)
    a = jnp.triu(upper, 1)
    a = a + a.T + jnp.eye(N, dtype=jnp.float32)
    deg = jnp.sum(a, axis=1)
    dinv = jnp.where(deg > 0, 1.0 / jnp.sqrt(deg), 0.0)
    adj = dinv[:, None] * a * dinv[None, :]

    params = init_peg_params(kp, in_channels, hidden_channels, out_channels,
                             num_layers)

    cfg = _tpu_config()
    out = jax.block_until_ready(peg_forward(params, x, adj, emb, cfg))
    ref = jax.block_until_ready(peg_forward_ref(params, x, adj, emb, cfg))

    assert out.shape == (N, out_channels), out.shape
    err = float(jnp.max(jnp.abs(out - ref)))
    assert jnp.allclose(out, ref, atol=5e-3, rtol=5e-3), f"max abs err {err}"
    print("KERNEL_OK")
</pallas_src>

<mosaic_0001>
module attributes {stable_mosaic.version = 11 : i64} {
  func.func @_peg_kernel_dist(%arg0: i32, %arg1: i32, %arg2: memref<1x2xf32, #tpu.memory_space<smem>>, %arg3: memref<128x256xbf16, #tpu.memory_space<vmem>>, %arg4: memref<128x256xbf16, #tpu.memory_space<vmem>>, %arg5: memref<256x32xbf16, #tpu.memory_space<vmem>>, %arg6: memref<1x32xf32, #tpu.memory_space<vmem>>, %arg7: memref<128x32xf32, #tpu.memory_space<vmem>>) attributes {dimension_semantics = [#tpu.dimension_semantics<parallel>, #tpu.dimension_semantics<arbitrary>], iteration_bounds = array<i64: 2, 1>, scalar_prefetch = 0 : i64, scratch_operands = 0 : i64, tpu.core_type = #tpu.core_type<tc>, window_params = [{transform_indices = @transform_0, window_bounds = array<i64: 1, 2>}, {transform_indices = @transform_1, window_bounds = array<i64: 128, 256>}, {transform_indices = @transform_2, window_bounds = array<i64: 128, 256>}, {transform_indices = @transform_3, window_bounds = array<i64: 256, 32>}, {pipeline_mode = #tpu.pipeline_mode<synchronous>, transform_indices = @transform_4, window_bounds = array<i64: 1, 32>}, {transform_indices = @transform_5, window_bounds = array<i64: 128, 32>}]} {
    %c0_i32 = arith.constant 0 : i32
    %0 = arith.cmpi eq, %arg1, %c0_i32 : i32
    %1 = arith.extui %0 : i1 to i32
    %c0_i32_0 = arith.constant 0 : i32
    %2 = arith.cmpi ne, %1, %c0_i32_0 : i32
    scf.if %2 {
      %c0_16 = arith.constant 0 : index
      %c0_17 = arith.constant 0 : index
      %26 = vector.load %arg6[%c0_16, %c0_17] : memref<1x32xf32, #tpu.memory_space<vmem>>, vector<1x32xf32>
      %27 = vector.shape_cast %26 : vector<1x32xf32> to vector<1x32xf32>
      %28 = vector.broadcast %27 : vector<1x32xf32> to vector<128x32xf32>
      %c0_18 = arith.constant 0 : index
      %c0_19 = arith.constant 0 : index
      %29 = vector.load %arg7[%c0_18, %c0_19] : memref<128x32xf32, #tpu.memory_space<vmem>>, vector<128x32xf32>
      tpu.vector_store %arg7[%c0_18, %c0_19], %28 {strides = array<i32>} : memref<128x32xf32, #tpu.memory_space<vmem>>, vector<128x32xf32>,
    } else {
    }
    %c0 = arith.constant 0 : index
    %c0_1 = arith.constant 0 : index
    %3 = memref.load %arg2[%c0, %c0_1] : memref<1x2xf32, #tpu.memory_space<smem>>
    %c0_2 = arith.constant 0 : index
    %c1 = arith.constant 1 : index
    %4 = memref.load %arg2[%c0_2, %c1] : memref<1x2xf32, #tpu.memory_space<smem>>
    %c0_3 = arith.constant 0 : index
    %c0_4 = arith.constant 0 : index
    %5 = vector.load %arg4[%c0_3, %c0_4] : memref<128x256xbf16, #tpu.memory_space<vmem>>, vector<128x256xbf16>
    %6 = arith.extf %5 : vector<128x256xbf16> to vector<128x256xf32>
    %7 = vector.broadcast %3 : f32 to vector<128x256xf32>
    %8 = arith.mulf %7, %6 : vector<128x256xf32>
    %9 = vector.broadcast %4 : f32 to vector<128x256xf32>
    %10 = arith.addf %8, %9 : vector<128x256xf32>
    %cst = arith.constant 5.000000e-01 : f32
    %11 = vector.broadcast %cst : f32 to vector<128x256xf32>
    %12 = arith.mulf %11, %10 : vector<128x256xf32>
    %13 = math.tanh %12 : vector<128x256xf32>
    %cst_5 = arith.constant 1.000000e+00 : f32
    %14 = vector.broadcast %cst_5 : f32 to vector<128x256xf32>
    %15 = arith.addf %14, %13 : vector<128x256xf32>
    %cst_6 = arith.constant 5.000000e-01 : f32
    %16 = vector.broadcast %cst_6 : f32 to vector<128x256xf32>
    %17 = arith.mulf %16, %15 : vector<128x256xf32>
    %c0_7 = arith.constant 0 : index
    %c0_8 = arith.constant 0 : index
    %18 = vector.load %arg3[%c0_7, %c0_8] : memref<128x256xbf16, #tpu.memory_space<vmem>>, vector<128x256xbf16>
    %19 = arith.truncf %17 : vector<128x256xf32> to vector<128x256xbf16>
    %20 = arith.mulf %18, %19 : vector<128x256xbf16>
    %c0_9 = arith.constant 0 : index
    %c0_10 = arith.constant 0 : index
    %21 = vector.load %arg7[%c0_9, %c0_10] : memref<128x32xf32, #tpu.memory_space<vmem>>, vector<128x32xf32>
    %c0_11 = arith.constant 0 : index
    %c0_12 = arith.constant 0 : index
    %22 = vector.load %arg5[%c0_11, %c0_12] : memref<256x32xbf16, #tpu.memory_space<vmem>>, vector<256x32xbf16>
    %cst_13 = arith.constant dense<0.000000e+00> : vector<128x32xf32>
    %23 = tpu.matmul %20, %22, %cst_13 {dimension_numbers = #tpu.dot_dimension_numbers<[1], [0], [0], [1], [0, 0, 1, 1], [], []>} : vector<128x256xbf16>, vector<256x32xbf16>, vector<128x32xf32> -> vector<128x32xf32>
    %24 = arith.addf %21, %23 : vector<128x32xf32>
    %c0_14 = arith.constant 0 : index
    %c0_15 = arith.constant 0 : index
    %25 = vector.load %arg7[%c0_14, %c0_15] : memref<128x32xf32, #tpu.memory_space<vmem>>, vector<128x32xf32>
    tpu.vector_store %arg7[%c0_14, %c0_15], %24 {strides = array<i32>} : memref<128x32xf32, #tpu.memory_space<vmem>>, vector<128x32xf32>,
    return
  }
  func.func @transform_0(%arg0: i32, %arg1: i32) -> (i32, i32) {
    %c0_i32 = arith.constant 0 : i32
    %c0_i32_0 = arith.constant 0 : i32
    %c0_i32_1 = arith.constant 0 : i32
    return %c0_i32, %c0_i32_0 : i32, i32
  }
  func.func @transform_1(%arg0: i32, %arg1: i32) -> (i32, i32) {
    %c0_i32 = arith.constant 0 : i32
    return %arg0, %arg1 : i32, i32
  }
  func.func @transform_2(%arg0: i32, %arg1: i32) -> (i32, i32) {
    %c0_i32 = arith.constant 0 : i32
    return %arg0, %arg1 : i32, i32
  }
  func.func @transform_3(%arg0: i32, %arg1: i32) -> (i32, i32) {
    %c0_i32 = arith.constant 0 : i32
    %c0_i32_0 = arith.constant 0 : i32
    return %arg1, %c0_i32 : i32, i32
  }
  func.func @transform_4(%arg0: i32, %arg1: i32) -> (i32, i32) {
    %c0_i32 = arith.constant 0 : i32
    %c0_i32_0 = arith.constant 0 : i32
    %c0_i32_1 = arith.constant 0 : i32
    return %c0_i32, %c0_i32_0 : i32, i32
  }
  func.func @transform_5(%arg0: i32, %arg1: i32) -> (i32, i32) {
    %c0_i32 = arith.constant 0 : i32
    %c0_i32_0 = arith.constant 0 : i32
    return %arg0, %c0_i32 : i32, i32
  }
}

</mosaic_0001>

<llo_original>
// kernel: tpu_custom_call.1
$region0: #{tpu_custom_call.1}
  #allocation0 [shape = 'u32[]', space=smem, size = 0x4, offset = 0x4, fixed_abs, tag = 'smem constant byte address 0x4 - core index']
  #allocation1 [shape = 'u32[72,128]{1,0:T(1,128)}', space=vmem, size = 0x9000, scoped, tag = 'internal scratch']
  %s0 = inlined_call_operand.vmem [shape: f32[1,2], index: 0, kind: input, shape index: {}]
  %s1 = inlined_call_operand.hbm [shape: bf16[256,256], index: 1, kind: input, shape index: {}]
  %s2 = inlined_call_operand.hbm [shape: bf16[256,256], index: 2, kind: input, shape index: {}]
  %s3 = inlined_call_operand.vmem [shape: bf16[256,32], index: 3, kind: input, shape index: {}]
  %s4 = inlined_call_operand.vmem [shape: f32[1,32], index: 4, kind: input, shape index: {}]
  %s5 = inlined_call_operand.vmem [shape: f32[256,32], index: 5, kind: output, shape index: {}]
  %s6 = sld [smem:[#allocation0]]
  $region69: #{tpu_custom_call.1} parent=0
    _
  %s8 = ssub.s32 1, %s6
  %s9 = scalar_select 0, %s8, %s6
  $region1: #{tpu_custom_call.1} parent=0
    #allocation2 [shape = 'u8[512]{0}', space=smem, size = 0x200, scoped, tag = 'input window, operand 0, single buffered']
    #allocation3 [shape = 's32[2]{0}', space=sflag, size = 0x8, scoped, tag = 'scoped memory for tpu_custom_call.1']
    #allocation4 [shape = 's32[2]{0}', space=sflag, size = 0x8, scoped, tag = 'scoped memory for tpu_custom_call.1']
    #allocation5 [shape = 'u8[131072]{0}', space=vmem, size = 0x20000, scoped, tag = 'input window, operand 1']
    #allocation6 [shape = 'u8[131072]{0}', space=vmem, size = 0x20000, scoped, tag = 'input window, operand 2']
    #allocation7 [shape = 's32[2]{0}', space=sflag, size = 0x8, scoped, tag = 'scoped memory for tpu_custom_call.1']
    %10 = vsyncpa [#allocation4], 0
    %11 = vsyncpa [#allocation3], 0
    %s12 = scalar_lea.sflag [#allocation3], 1
    %13 = vsyncpa %s12, 0
    %14 = vsyncpa [#allocation7], 0
    %s15 = scalar_lea.sflag [#allocation7], 1
    %16 = vsyncpa %s15, 0
    loop: start=0, step=1, limit=4
    $region2: #{tpu_custom_call.1} parent=1 // loop_pre_header
      _
    $region3: #{tpu_custom_call.1} parent=1 // loop_header
      %s18 = sphi 0, %s22
      %p19 = scmp.ge.s32.totalorder %s18, 4
      %s25 = sphi 0, %s37
      %s26 = sphi 0, %s33
      %s27 = sphi 0, %s25
      %s28 = sphi 0, %s26
      %s29 = sphi 0, %s27
      %s30 = sphi 0, %s28
      %s38 = sphi 0, %s38
      %s40 = sphi 0, %s38
      %s41 = sphi 0, %s40
      %s55 = sphi 0, %s41
      %s63 = sphi 0, %s65
      %s66 = sphi 0, %s63
      %s67 = sphi 0, %s66
      %s83 = sphi 0, %s67
      %s91 = sphi 0, %s93
      %s94 = sphi 0, %s91
      %s95 = sphi 0, %s94
      %s111 = sphi 0, %s95
      %s117 = sphi 0, %s119
      %s120 = sphi 0, %s117
      %s121 = sphi 0, %s120
      %s137 = sphi 0, %s121
      %s141 = sphi 0, %s141
      %s143 = sphi 0, %s141
      %s144 = sphi 0, %s143
      %s158 = sphi 0, %s144
      %s164 = sphi 0, %s166
      %s167 = sphi 0, %s164
      %s168 = sphi 0, %s167
      %s184 = sphi 0, %s168
    $region4: #{tpu_custom_call.1} parent=1 // loop_header_branch
      %21 = sbr.rel (%p19) target = $region8
    $region5: #{tpu_custom_call.1} parent=1 // loop_body
      %s23 = ssub.s32 %s18, 1
      %s24 = ssub.s32 %s18, 2
      %s31 = sadd.s32 1, %s26
      %p32 = scmp.ge.s32.totalorder %s31, 1
      %s33 = scalar_select %p32, 0, %s31
      %s34 = sadd.s32 1, %s25
      %s35 = scalar_select %p32, %s34, %s25
      %p36 = scmp.ge.s32.totalorder %s35, 2
      %s37 = scalar_select %p36, 0, %s35
      %s39 = sadd.s32 %s38, 1
      %p42 = scmp.eq.s32.totalorder %s18, 1
      %p43 = scmp.ne.s32.totalorder %s38, %s40
      %p44 = scmp.eq.s32.totalorder %s18, 0
      %p45 = por %p43, %p44
      %p46 = scmp.ne.s32.totalorder %s38, %s40
      %p47 = scmp.eq.s32.totalorder %s23, 1
      %p48 = por %p46, %p47
      %p49 = scmp.ne.s32.totalorder %s40, %s41
      %p50 = scmp.eq.s32.totalorder %s23, 0
      %p51 = por %p49, %p50
      %p52 = scmp.ne.s32.totalorder %s40, %s41
      %p53 = scmp.eq.s32.totalorder %s24, 1
      %p54 = por %p52, %p53
      %p56 = scmp.ne.s32.totalorder %s41, %s55
      %p57 = scmp.eq.s32.totalorder %s24, 0
      %p58 = por %p56, %p57
      %s59 = ssub.s32 %s25, %s37
      %s60 = ssub.s32 %s26, %s33
      %s61 = sor.u32 %s59, %s60
      %p62 = scmp.eq.s32.totalorder %s61, 0
      %s64 = sadd.s32 %s63, 1
      %s65 = scalar_select %p62, %s63, %s64
      %p68 = pneg %p62
      %p69 = scmp.eq.s32.totalorder %s18, 1
      %p70 = por %p68, %p69
      %p71 = scmp.ne.s32.totalorder %s63, %s66
      %p72 = scmp.eq.s32.totalorder %s18, 0
      %p73 = por %p71, %p72
      %p74 = scmp.ne.s32.totalorder %s63, %s66
      %p75 = scmp.eq.s32.totalorder %s23, 1
      %p76 = por %p74, %p75
      %p77 = scmp.ne.s32.totalorder %s66, %s67
      %p78 = scmp.eq.s32.totalorder %s23, 0
      %p79 = por %p77, %p78
      %p80 = scmp.ne.s32.totalorder %s66, %s67
      %p81 = scmp.eq.s32.totalorder %s24, 1
      %p82 = por %p80, %p81
      %p84 = scmp.ne.s32.totalorder %s67, %s83
      %p85 = scmp.eq.s32.totalorder %s24, 0
      %p86 = por %p84, %p85
      %s87 = ssub.s32 %s25, %s37
      %s88 = ssub.s32 %s26, %s33
      %s89 = sor.u32 %s87, %s88
      %p90 = scmp.eq.s32.totalorder %s89, 0
      %s92 = sadd.s32 %s91, 1
      %s93 = scalar_select %p90, %s91, %s92
      %p96 = pneg %p90
      %p97 = scmp.eq.s32.totalorder %s18, 1
      %p98 = por %p96, %p97
      %p99 = scmp.ne.s32.totalorder %s91, %s94
      %p100 = scmp.eq.s32.totalorder %s18, 0
      %p101 = por %p99, %p100
      %p102 = scmp.ne.s32.totalorder %s91, %s94
      %p103 = scmp.eq.s32.totalorder %s23, 1
      %p104 = por %p102, %p103
      %p105 = scmp.ne.s32.totalorder %s94, %s95
      %p106 = scmp.eq.s32.totalorder %s23, 0
      %p107 = por %p105, %p106
      %p108 = scmp.ne.s32.totalorder %s94, %s95
      %p109 = scmp.eq.s32.totalorder %s24, 1
      %p110 = por %p108, %p109
      %p112 = scmp.ne.s32.totalorder %s95, %s111
      %p113 = scmp.eq.s32.totalorder %s24, 0
      %p114 = por %p112, %p113
      %s115 = ssub.s32 %s26, %s33
      %p116 = scmp.eq.s32.totalorder %s115, 0
      %s118 = sadd.s32 %s117, 1
      %s119 = scalar_select %p116, %s117, %s118
      %p122 = pneg %p116
      %p123 = scmp.eq.s32.totalorder %s18, 1
      %p124 = por %p122, %p123
      %p125 = scmp.ne.s32.totalorder %s117, %s120
      %p126 = scmp.eq.s32.totalorder %s18, 0
      %p127 = por %p125, %p126
      %p128 = scmp.ne.s32.totalorder %s117, %s120
      %p129 = scmp.eq.s32.totalorder %s23, 1
      %p130 = por %p128, %p129
      %p131 = scmp.ne.s32.totalorder %s120, %s121
      %p132 = scmp.eq.s32.totalorder %s23, 0
      %p133 = por %p131, %p132
      %p134 = scmp.ne.s32.totalorder %s120, %s121
      %p135 = scmp.eq.s32.totalorder %s24, 1
      %p136 = por %p134, %p135
      %p138 = scmp.ne.s32.totalorder %s121, %s137
      %p139 = scmp.eq.s32.totalorder %s24, 0
      %p140 = por %p138, %p139
      %s142 = sadd.s32 %s141, 1
      %p145 = scmp.eq.s32.totalorder %s18, 1
      %p146 = scmp.ne.s32.totalorder %s141, %s143
      %p147 = scmp.eq.s32.totalorder %s18, 0
      %p148 = por %p146, %p147
      %p149 = scmp.ne.s32.totalorder %s141, %s143
      %p150 = scmp.eq.s32.totalorder %s23, 1
      %p151 = por %p149, %p150
      %p152 = scmp.ne.s32.totalorder %s143, %s144
      %p153 = scmp.eq.s32.totalorder %s23, 0
      %p154 = por %p152, %p153
      %p155 = scmp.ne.s32.totalorder %s143, %s144
      %p156 = scmp.eq.s32.totalorder %s24, 1
      %p157 = por %p155, %p156
      %p159 = scmp.ne.s32.totalorder %s144, %s158
      %p160 = scmp.eq.s32.totalorder %s24, 0
      %p161 = por %p159, %p160
      %s162 = ssub.s32 %s25, %s37
      %p163 = scmp.eq.s32.totalorder %s162, 0
      %s165 = sadd.s32 %s164, 1
      %s166 = scalar_select %p163, %s164, %s165
      %p169 = pneg %p163
      %p170 = scmp.eq.s32.totalorder %s18, 1
      %p171 = por %p169, %p170
      %p172 = scmp.ne.s32.totalorder %s164, %s167
      %p173 = scmp.eq.s32.totalorder %s18, 0
      %p174 = por %p172, %p173
      %p175 = scmp.ne.s32.totalorder %s164, %s167
      %p176 = scmp.eq.s32.totalorder %s23, 1
      %p177 = por %p175, %p176
      %p178 = scmp.ne.s32.totalorder %s167, %s168
      %p179 = scmp.eq.s32.totalorder %s23, 0
      %p180 = por %p178, %p179
      %p181 = scmp.ne.s32.totalorder %s167, %s168
      %p182 = scmp.eq.s32.totalorder %s24, 1
      %p183 = por %p181, %p182
      %p185 = scmp.ne.s32.totalorder %s168, %s184
      %p186 = scmp.eq.s32.totalorder %s24, 0
      %p187 = por %p185, %p186
      %p188 = scmp.le.s32.totalorder 1, %s18
      %p189 = scmp.lt.s32.totalorder %s18, 3
      %p190 = pnand %p188, %p189
      %p191 = pneg %p190
      // Predicated region
      $region9: #{tpu_custom_call.1} parent=5 // pred_check
        _
      $region10: #{tpu_custom_call.1} parent=5 // pred_check_branch
        %193 = sbr.rel (%p190) target = $region12
      $region11: #{tpu_custom_call.1} parent=5 // pred_region
        %s194 = ssub.s32 %s18, 1
        // Predicated region
        $region13: #{tpu_custom_call.1} parent=11 // pred_check
          %p195 = pneg %p51
        $region14: #{tpu_custom_call.1} parent=11 // pred_check_branch
          %197 = sbr.rel (%p195) target = $region16
        $region15: #{tpu_custom_call.1} parent=11 // pred_region
          %199 = vsyncadd [#allocation4], 0
          %s201 = sshll.u32 %s0, 4
          %s202 = int_to_ptr.vmem [resolvable:$true] %s201
          %204 = dma.vmem_to_smem %s202, 16, [#allocation2], [#allocation4]
        $region16: #{tpu_custom_call.1} parent=11 // pred_fallthru
          _
        // Predicated region
        $region17: #{tpu_custom_call.1} parent=11 // pred_check
          %p205 = pneg %p133
        $region18: #{tpu_custom_call.1} parent=11 // pred_check_branch
          %207 = sbr.rel (%p205) target = $region20
        $region19: #{tpu_custom_call.1} parent=11 // pred_region
          %s208 = smul.u32 32, %s28
          %p209 = scmp.lt.s32.totalorder %s208, 31
          %s210 = scalar_select %p209, %s208, 31
          %s211 = smul.addr %s210, 4
          %s212 = scalar_lea.vmem %s3, %s211
          %s213 = smul.u32 32, %s28
        $region20: #{tpu_custom_call.1} parent=11 // pred_fallthru
          _
        // Predicated region
        $region21: #{tpu_custom_call.1} parent=11 // pred_check
          %p214 = pneg %p154
        $region22: #{tpu_custom_call.1} parent=11 // pred_check_branch
          %216 = sbr.rel (%p214) target = $region24
        $region23: #{tpu_custom_call.1} parent=11 // pred_region
          _
        $region24: #{tpu_custom_call.1} parent=11 // pred_fallthru
          _
      $region12: #{tpu_custom_call.1} parent=5 // pred_fallthru
        _
      %p217 = scmp.lt.s32.totalorder %s18, 2
      // Predicated region
      $region25: #{tpu_custom_call.1} parent=5 // pred_check
        %p218 = pneg %p217
      $region26: #{tpu_custom_call.1} parent=5 // pred_check_branch
        %220 = sbr.rel (%p218) target = $region28
      $region27: #{tpu_custom_call.1} parent=5 // pred_region
        // Predicated region
        $region29: #{tpu_custom_call.1} parent=27 // pred_check
          %p221 = pneg %p73
        $region30: #{tpu_custom_call.1} parent=27 // pred_check_branch
          %223 = sbr.rel (%p221) target = $region32
        $region31: #{tpu_custom_call.1} parent=27 // pred_region
          %s224 = sand.u32 %s63, 1
          %s225 = scalar_lea.sflag [#allocation3], %s224
          %s226 = sand.u32 %s63, 1
          %s227 = smul.addr %s226, 128
          %s228 = scalar_lea.vmem [#allocation5], %s227
          %s229 = smul.u32 16, %s25
          %s230 = smul.u32 2, %s26
          %232 = vsyncadd %s225, 0
          %s233 = smul.addr %s229, 2
          %s234 = sadd.s32 %s230, %s233
          %s235 = smul.addr %s234, 4
          %s236 = scalar_lea.hbm %s1, %s235
          %s237 = sshll.u32 %s236, 4
          %s238 = int_to_ptr.hbm [resolvable:$true] %s237
          %s239 = sshll.u32 %s228, 4
          %s240 = int_to_ptr.vmem [resolvable:$true] %s239
          %245 = dma.hbm_to_vmem [thread:$0]  %s238, 2048, %s240, %s225, 128, 128, 8
        $region32: #{tpu_custom_call.1} parent=27 // pred_fallthru
          _
        // Predicated region
        $region33: #{tpu_custom_call.1} parent=27 // pred_check
          %p246 = pneg %p101
        $region34: #{tpu_custom_call.1} parent=27 // pred_check_branch
          %248 = sbr.rel (%p246) target = $region36
        $region35: #{tpu_custom_call.1} parent=27 // pred_region
          %s249 = sand.u32 %s91, 1
          %s250 = scalar_lea.sflag [#allocation7], %s249
          %s251 = sand.u32 %s91, 1
          %s252 = smul.addr %s251, 128
          %s253 = scalar_lea.vmem [#allocation6], %s252
          %s254 = smul.u32 16, %s25
          %s255 = smul.u32 2, %s26
          %257 = vsyncadd %s250, 0
          %s258 = smul.addr %s254, 2
          %s259 = sadd.s32 %s255, %s258
          %s260 = smul.addr %s259, 4
          %s261 = scalar_lea.hbm %s2, %s260
          %s262 = sshll.u32 %s261, 4
          %s263 = int_to_ptr.hbm [resolvable:$true] %s262
          %s264 = sshll.u32 %s253, 4
          %s265 = int_to_ptr.vmem [resolvable:$true] %s264
          %270 = dma.hbm_to_vmem [thread:$0]  %s263, 2048, %s265, %s250, 128, 128, 8
        $region36: #{tpu_custom_call.1} parent=27 // pred_fallthru
          _
      $region28: #{tpu_custom_call.1} parent=5 // pred_fallthru
        _
      %p271 = scmp.le.s32.totalorder 1, %s18
      %p272 = scmp.lt.s32.totalorder %s18, 3
      %p273 = pnand %p271, %p272
      %p274 = pneg %p273
      // Predicated region
      $region37: #{tpu_custom_call.1} parent=5 // pred_check
        _
      $region38: #{tpu_custom_call.1} parent=5 // pred_check_branch
        %276 = sbr.rel (%p273) target = $region40
      $region39: #{tpu_custom_call.1} parent=5 // pred_region
        %s277 = ssub.s32 %s18, 1
        // Predicated region
        $region41: #{tpu_custom_call.1} parent=39 // pred_check
          %p278 = pneg %p51
        $region42: #{tpu_custom_call.1} parent=39 // pred_check_branch
          %280 = sbr.rel (%p278) target = $region44
        $region43: #{tpu_custom_call.1} parent=39 // pred_region
          %282 = dma.done [#allocation4], 16
        $region44: #{tpu_custom_call.1} parent=39 // pred_fallthru
          _
        %s283 = sand.u32 %s66, 1
        %s284 = scalar_lea.sflag [#allocation3], %s283
        %s285 = sand.u32 %s66, 1
        %s286 = smul.addr %s285, 128
        %s287 = scalar_lea.vmem [#allocation5], %s286
        // Predicated region
        $region45: #{tpu_custom_call.1} parent=39 // pred_check
          %p288 = pneg %p79
        $region46: #{tpu_custom_call.1} parent=39 // pred_check_branch
          %290 = sbr.rel (%p288) target = $region48
        $region47: #{tpu_custom_call.1} parent=39 // pred_region
          %292 = dma.done %s284, 2048
        $region48: #{tpu_custom_call.1} parent=39 // pred_fallthru
          _
        %s293 = sand.u32 %s94, 1
        %s294 = scalar_lea.sflag [#allocation7], %s293
        %s295 = sand.u32 %s94, 1
        %s296 = smul.addr %s295, 128
        %s297 = scalar_lea.vmem [#allocation6], %s296
        // Predicated region
        $region49: #{tpu_custom_call.1} parent=39 // pred_check
          %p298 = pneg %p107
        $region50: #{tpu_custom_call.1} parent=39 // pred_check_branch
          %300 = sbr.rel (%p298) target = $region52
        $region51: #{tpu_custom_call.1} parent=39 // pred_region
          %302 = dma.done %s294, 2048
        $region52: #{tpu_custom_call.1} parent=39 // pred_fallthru
          _
        %303 = sfence
        %p304 = pneg %p51
        %p305 = pneg %p48
        %s306 = sand.u32 %s66, 1
        %s307 = scalar_lea.sflag [#allocation3], %s306
        %s308 = sand.u32 %s66, 1
        %s309 = smul.addr %s308, 128
        %s310 = scalar_lea.vmem [#allocation5], %s309
        %p311 = pneg %p79
        %p312 = pneg %p76
        %s313 = sand.u32 %s94, 1
        %s314 = scalar_lea.sflag [#allocation7], %s313
        %s315 = sand.u32 %s94, 1
        %s316 = smul.addr %s315, 128
        %s317 = scalar_lea.vmem [#allocation6], %s316
        %p318 = pneg %p107
        %p319 = pneg %p104
        %s320 = smul.u32 32, %s28
        %p321 = scmp.lt.s32.totalorder %s320, 31
        %s322 = scalar_select %p321, %s320, 31
        %s323 = smul.addr %s322, 4
        %s324 = scalar_lea.vmem %s3, %s323
        %p325 = pneg %p133
        %p326 = pneg %p130
        %p327 = pneg %p154
        %p328 = pneg %p151
        %p329 = pneg %p180
        %p330 = pneg %p177
        %s331 = smul.u32 16, %s27
        %p332 = scmp.lt.s32.totalorder %s331, 31
        %s333 = scalar_select %p332, %s331, 31
        %s334 = smul.addr %s333, 8
        %s335 = scalar_lea.vmem %s5, %s334
        %s336 = smul.u32 16, %s27
        %s337 = smul.u32 2, %s28
        %s338 = smul.u32 16, %s27
        %s339 = smul.u32 2, %s28
        %s340 = smul.u32 32, %s28
        %p341 = scmp.lt.s32.totalorder %s340, 31
        %s342 = scalar_select %p341, %s340, 31
        %s343 = smul.addr %s342, 4
        %s344 = scalar_lea.vmem %s3, %s343
        %s345 = smul.u32 32, %s28
        %s346 = smul.u32 16, %s27
        %p347 = scmp.lt.s32.totalorder %s346, 31
        %s348 = scalar_select %p347, %s346, 31
        %s349 = smul.addr %s348, 8
        %s350 = scalar_lea.vmem %s5, %s349
        %s351 = smul.u32 16, %s27
        %p352 = scmp.eq.s32.totalorder %s28, 0
        // Predicated region
        $region53: #{tpu_custom_call.1} parent=39 // pred_check
          %p353 = pneg %p352
        $region54: #{tpu_custom_call.1} parent=39 // pred_check_branch
          %355 = sbr.rel (%p353) target = $region56
        $region55: #{tpu_custom_call.1} parent=39 // pred_region
          %v356 = vld [vmem:[%s4] sm:$0x1]
          %v358 = vperm.slane %v356, 0
          %vm360 = vcmask 261120
          %361 = vst.msk [vmem:[%s350] sm:$0xff] %vm360, %v358
          %362 = vst.msk [vmem:[%s350 + $0x8] sm:$0xff] %vm360, %v358
          %363 = vst.msk [vmem:[%s350 + $0x10] sm:$0xff] %vm360, %v358
          %364 = vst.msk [vmem:[%s350 + $0x18] sm:$0xff] %vm360, %v358
          %365 = vst.msk [vmem:[%s350 + $0x20] sm:$0xff] %vm360, %v358
          %366 = vst.msk [vmem:[%s350 + $0x28] sm:$0xff] %vm360, %v358
          %367 = vst.msk [vmem:[%s350 + $0x30] sm:$0xff] %vm360, %v358
          %368 = vst.msk [vmem:[%s350 + $0x38] sm:$0xff] %vm360, %v358
          %369 = vst.msk [vmem:[%s350 + $0x40] sm:$0xff] %vm360, %v358
          %370 = vst.msk [vmem:[%s350 + $0x48] sm:$0xff] %vm360, %v358
          %371 = vst.msk [vmem:[%s350 + $0x50] sm:$0xff] %vm360, %v358
          %372 = vst.msk [vmem:[%s350 + $0x58] sm:$0xff] %vm360, %v358
          %373 = vst.msk [vmem:[%s350 + $0x60] sm:$0xff] %vm360, %v358
          %374 = vst.msk [vmem:[%s350 + $0x68] sm:$0xff] %vm360, %v358
          %375 = vst.msk [vmem:[%s350 + $0x70] sm:$0xff] %vm360, %v358
          %376 = vst.msk [vmem:[%s350 + $0x78] sm:$0xff] %vm360, %v358
        $region56: #{tpu_custom_call.1} parent=39 // pred_fallthru
          _
        %s377 = sld [smem:[#allocation2]]
        %s378 = sld [smem:[#allocation2 + $0x1]]
        %v379 = vld [vmem:[%s297] sm:$0xff]
        %v380 = vld [vmem:[%s297 + $0x8] sm:$0xff]
        %v381 = vld [vmem:[%s297 + $0x10] sm:$0xff]
        %v382 = vld [vmem:[%s297 + $0x18] sm:$0xff]
        %v383 = vld [vmem:[%s297 + $0x20] sm:$0xff]
        %v384 = vld [vmem:[%s297 + $0x28] sm:$0xff]
        %v385 = vld [vmem:[%s297 + $0x30] sm:$0xff]
        %v386 = vld [vmem:[%s297 + $0x38] sm:$0xff]
        %v387 = vld [vmem:[%s297 + $0x40] sm:$0xff]
        %v388 = vld [vmem:[%s297 + $0x48] sm:$0xff]
        %v389 = vld [vmem:[%s297 + $0x50] sm:$0xff]
        %v390 = vld [vmem:[%s297 + $0x58] sm:$0xff]
        %v391 = vld [vmem:[%s297 + $0x60] sm:$0xff]
        %v392 = vld [vmem:[%s297 + $0x68] sm:$0xff]
        %v393 = vld [vmem:[%s297 + $0x70] sm:$0xff]
        %v394 = vld [vmem:[%s297 + $0x78] sm:$0xff]
        %v395 = vunpack.c.l.bf16 %v379
        %v396 = vunpack.c.h.bf16 %v379
        %v397 = vunpack.c.l.bf16 %v380
        %v398 = vunpack.c.h.bf16 %v380
        %v399 = vunpack.c.l.bf16 %v381
        %v400 = vunpack.c.h.bf16 %v381
        %v401 = vunpack.c.l.bf16 %v382
        %v402 = vunpack.c.h.bf16 %v382
        %v403 = vunpack.c.l.bf16 %v383
        %v404 = vunpack.c.h.bf16 %v383
        %v405 = vunpack.c.l.bf16 %v384
        %v406 = vunpack.c.h.bf16 %v384
        %v407 = vunpack.c.l.bf16 %v385
        %v408 = vunpack.c.h.bf16 %v385
        %v409 = vunpack.c.l.bf16 %v386
        %v410 = vunpack.c.h.bf16 %v386
        %v411 = vunpack.c.l.bf16 %v387
        %v412 = vunpack.c.h.bf16 %v387
        %v413 = vunpack.c.l.bf16 %v388
        %v414 = vunpack.c.h.bf16 %v388
        %v415 = vunpack.c.l.bf16 %v389
        %v416 = vunpack.c.h.bf16 %v389
        %v417 = vunpack.c.l.bf16 %v390
        %v418 = vunpack.c.h.bf16 %v390
        %v419 = vunpack.c.l.bf16 %v391
        %v420 = vunpack.c.h.bf16 %v391
        %v421 = vunpack.c.l.bf16 %v392
        %v422 = vunpack.c.h.bf16 %v392
        %v423 = vunpack.c.l.bf16 %v393
        %v424 = vunpack.c.h.bf16 %v393
        %v425 = vunpack.c.l.bf16 %v394
        %v426 = vunpack.c.h.bf16 %v394
        %v427 = vstv %s377
        %v428 = vmul.f32 %v427, %v395
        %v429 = vmul.f32 %v427, %v396
        %v430 = vmul.f32 %v427, %v397
        %v431 = vmul.f32 %v427, %v398
        %v432 = vmul.f32 %v427, %v399
        %v433 = vmul.f32 %v427, %v400
        %v434 = vmul.f32 %v427, %v401
        %v435 = vmul.f32 %v427, %v402
        %v436 = vmul.f32 %v427, %v403
        %v437 = vmul.f32 %v427, %v404
        %v438 = vmul.f32 %v427, %v405
        %v439 = vmul.f32 %v427, %v406
        %v440 = vmul.f32 %v427, %v407
        %v441 = vmul.f32 %v427, %v408
        %v442 = vmul.f32 %v427, %v409
        %v443 = vmul.f32 %v427, %v410
        %v444 = vmul.f32 %v427, %v411
        %v445 = vmul.f32 %v427, %v412
        %v446 = vmul.f32 %v427, %v413
        %v447 = vmul.f32 %v427, %v414
        %v448 = vmul.f32 %v427, %v415
        %v449 = vmul.f32 %v427, %v416
        %v450 = vmul.f32 %v427, %v417
        %v451 = vmul.f32 %v427, %v418
        %v452 = vmul.f32 %v427, %v419
        %v453 = vmul.f32 %v427, %v420
        %v454 = vmul.f32 %v427, %v421
        %v455 = vmul.f32 %v427, %v422
        %v456 = vmul.f32 %v427, %v423
        %v457 = vmul.f32 %v427, %v424
        %v458 = vmul.f32 %v427, %v425
        %v459 = vmul.f32 %v427, %v426
        %v460 = vstv %s378
        %v461 = vadd.f32 %v428, %v460
        %v462 = vadd.f32 %v429, %v460
        %v463 = vadd.f32 %v430, %v460
        %v464 = vadd.f32 %v431, %v460
        %v465 = vadd.f32 %v432, %v460
        %v466 = vadd.f32 %v433, %v460
        %v467 = vadd.f32 %v434, %v460
        %v468 = vadd.f32 %v435, %v460
        %v469 = vadd.f32 %v436, %v460
        %v470 = vadd.f32 %v437, %v460
        %v471 = vadd.f32 %v438, %v460
        %v472 = vadd.f32 %v439, %v460
        %v473 = vadd.f32 %v440, %v460
        %v474 = vadd.f32 %v441, %v460
        %v475 = vadd.f32 %v442, %v460
        %v476 = vadd.f32 %v443, %v460
        %v477 = vadd.f32 %v444, %v460
        %v478 = vadd.f32 %v445, %v460
        %v479 = vadd.f32 %v446, %v460
        %v480 = vadd.f32 %v447, %v460
        %v481 = vadd.f32 %v448, %v460
        %v482 = vadd.f32 %v449, %v460
        %v483 = vadd.f32 %v450, %v460
        %v484 = vadd.f32 %v451, %v460
        %v485 = vadd.f32 %v452, %v460
        %v486 = vadd.f32 %v453, %v460
        %v487 = vadd.f32 %v454, %v460
        %v488 = vadd.f32 %v455, %v460
        %v489 = vadd.f32 %v456, %v460
        %v490 = vadd.f32 %v457, %v460
        %v491 = vadd.f32 %v458, %v460
        %v492 = vadd.f32 %v459, %v460
        %v493 = vmul.f32 %v461, 0.5
        %v494 = vmul.f32 %v462, 0.5
        %v495 = vmul.f32 %v463, 0.5
        %v496 = vmul.f32 %v464, 0.5
        %v497 = vmul.f32 %v465, 0.5
        %v498 = vmul.f32 %v466, 0.5
        %v499 = vmul.f32 %v467, 0.5
        %v500 = vmul.f32 %v468, 0.5
        %v501 = vmul.f32 %v469, 0.5
        %v502 = vmul.f32 %v470, 0.5
        %v503 = vmul.f32 %v471, 0.5
        %v504 = vmul.f32 %v472, 0.5
        %v505 = vmul.f32 %v473, 0.5
        %v506 = vmul.f32 %v474, 0.5
        %v507 = vmul.f32 %v475, 0.5
        %v508 = vmul.f32 %v476, 0.5
        %v509 = vmul.f32 %v477, 0.5
        %v510 = vmul.f32 %v478, 0.5
        %v511 = vmul.f32 %v479, 0.5
        %v512 = vmul.f32 %v480, 0.5
        %v513 = vmul.f32 %v481, 0.5
        %v514 = vmul.f32 %v482, 0.5
        %v515 = vmul.f32 %v483, 0.5
        %v516 = vmul.f32 %v484, 0.5
        %v517 = vmul.f32 %v485, 0.5
        %v518 = vmul.f32 %v486, 0.5
        %v519 = vmul.f32 %v487, 0.5
        %v520 = vmul.f32 %v488, 0.5
        %v521 = vmul.f32 %v489, 0.5
        %v522 = vmul.f32 %v490, 0.5
        %v523 = vmul.f32 %v491, 0.5
        %v524 = vmul.f32 %v492, 0.5
        %v525 = vtanh.pop %v493
        %v526 = vtanh.pop %v494
        %v527 = vtanh.pop %v495
        %v528 = vtanh.pop %v496
        %v529 = vtanh.pop %v497
        %v530 = vtanh.pop %v498
        %v531 = vtanh.pop %v499
        %v532 = vtanh.pop %v500
        %v533 = vtanh.pop %v501
        %v534 = vtanh.pop %v502
        %v535 = vtanh.pop %v503
        %v536 = vtanh.pop %v504
        %v537 = vtanh.pop %v505
        %v538 = vtanh.pop %v506
        %v539 = vtanh.pop %v507
        %v540 = vtanh.pop %v508
        %v541 = vtanh.pop %v509
        %v542 = vtanh.pop %v510
        %v543 = vtanh.pop %v511
        %v544 = vtanh.pop %v512
        %v545 = vtanh.pop %v513
        %v546 = vtanh.pop %v514
        %v547 = vtanh.pop %v515
        %v548 = vtanh.pop %v516
        %v549 = vtanh.pop %v517
        %v550 = vtanh.pop %v518
        %v551 = vtanh.pop %v519
        %v552 = vtanh.pop %v520
        %v553 = vtanh.pop %v521
        %v554 = vtanh.pop %v522
        %v555 = vtanh.pop %v523
        %v556 = vtanh.pop %v524
        %v557 = vadd.f32 %v525, 1.0
        %v558 = vadd.f32 %v526, 1.0
        %v559 = vadd.f32 %v527, 1.0
        %v560 = vadd.f32 %v528, 1.0
        %v561 = vadd.f32 %v529, 1.0
        %v562 = vadd.f32 %v530, 1.0
        %v563 = vadd.f32 %v531, 1.0
        %v564 = vadd.f32 %v532, 1.0
        %v565 = vadd.f32 %v533, 1.0
        %v566 = vadd.f32 %v534, 1.0
        %v567 = vadd.f32 %v535, 1.0
        %v568 = vadd.f32 %v536, 1.0
        %v569 = vadd.f32 %v537, 1.0
        %v570 = vadd.f32 %v538, 1.0
        %v571 = vadd.f32 %v539, 1.0
        %v572 = vadd.f32 %v540, 1.0
        %v573 = vadd.f32 %v541, 1.0
        %v574 = vadd.f32 %v542, 1.0
        %v575 = vadd.f32 %v543, 1.0
        %v576 = vadd.f32 %v544, 1.0
        %v577 = vadd.f32 %v545, 1.0
        %v578 = vadd.f32 %v546, 1.0
        %v579 = vadd.f32 %v547, 1.0
        %v580 = vadd.f32 %v548, 1.0
        %v581 = vadd.f32 %v549, 1.0
        %v582 = vadd.f32 %v550, 1.0
        %v583 = vadd.f32 %v551, 1.0
        %v584 = vadd.f32 %v552, 1.0
        %v585 = vadd.f32 %v553, 1.0
        %v586 = vadd.f32 %v554, 1.0
        %v587 = vadd.f32 %v555, 1.0
        %v588 = vadd.f32 %v556, 1.0
        %v589 = vmul.f32 %v557, 0.5
        %v590 = vmul.f32 %v558, 0.5
        %v591 = vmul.f32 %v559, 0.5
        %v592 = vmul.f32 %v560, 0.5
        %v593 = vmul.f32 %v561, 0.5
        %v594 = vmul.f32 %v562, 0.5
        %v595 = vmul.f32 %v563, 0.5
        %v596 = vmul.f32 %v564, 0.5
        %v597 = vmul.f32 %v565, 0.5
        %v598 = vmul.f32 %v566, 0.5
        %v599 = vmul.f32 %v567, 0.5
        %v600 = vmul.f32 %v568, 0.5
        %v601 = vmul.f32 %v569, 0.5
        %v602 = vmul.f32 %v570, 0.5
        %v603 = vmul.f32 %v571, 0.5
        %v604 = vmul.f32 %v572, 0.5
        %v605 = vmul.f32 %v573, 0.5
        %v606 = vmul.f32 %v574, 0.5
        %v607 = vmul.f32 %v575, 0.5
        %v608 = vmul.f32 %v576, 0.5
        %v609 = vmul.f32 %v577, 0.5
        %v610 = vmul.f32 %v578, 0.5
        %v611 = vmul.f32 %v579, 0.5
        %v612 = vmul.f32 %v580, 0.5
        %v613 = vmul.f32 %v581, 0.5
        %v614 = vmul.f32 %v582, 0.5
        %v615 = vmul.f32 %v583, 0.5
        %v616 = vmul.f32 %v584, 0.5
        %v617 = vmul.f32 %v585, 0.5
        %v618 = vmul.f32 %v586, 0.5
        %v619 = vmul.f32 %v587, 0.5
        %v620 = vmul.f32 %v588, 0.5
        %v621 = vld [vmem:[%s287] sm:$0xff]
        %v622 = vld [vmem:[%s287 + $0x8] sm:$0xff]
        %v623 = vld [vmem:[%s287 + $0x10] sm:$0xff]
        %v624 = vld [vmem:[%s287 + $0x18] sm:$0xff]
        %v625 = vld [vmem:[%s287 + $0x20] sm:$0xff]
        %v626 = vld [vmem:[%s287 + $0x28] sm:$0xff]
        %v627 = vld [vmem:[%s287 + $0x30] sm:$0xff]
        %v628 = vld [vmem:[%s287 + $0x38] sm:$0xff]
        %v629 = vld [vmem:[%s287 + $0x40] sm:$0xff]
        %v630 = vld [vmem:[%s287 + $0x48] sm:$0xff]
        %v631 = vld [vmem:[%s287 + $0x50] sm:$0xff]
        %v632 = vld [vmem:[%s287 + $0x58] sm:$0xff]
        %v633 = vld [vmem:[%s287 + $0x60] sm:$0xff]
        %v634 = vld [vmem:[%s287 + $0x68] sm:$0xff]
        %v635 = vld [vmem:[%s287 + $0x70] sm:$0xff]
        %v636 = vld [vmem:[%s287 + $0x78] sm:$0xff]
        %v637 = vpack.c.bf16 %v590, %v589
        %v638 = vpack.c.bf16 %v592, %v591
        %v639 = vpack.c.bf16 %v594, %v593
        %v640 = vpack.c.bf16 %v596, %v595
        %v641 = vpack.c.bf16 %v598, %v597
        %v642 = vpack.c.bf16 %v600, %v599
        %v643 = vpack.c.bf16 %v602, %v601
        %v644 = vpack.c.bf16 %v604, %v603
        %v645 = vpack.c.bf16 %v606, %v605
        %v646 = vpack.c.bf16 %v608, %v607
        %v647 = vpack.c.bf16 %v610, %v609
        %v648 = vpack.c.bf16 %v612, %v611
        %v649 = vpack.c.bf16 %v614, %v613
        %v650 = vpack.c.bf16 %v616, %v615
        %v651 = vpack.c.bf16 %v618, %v617
        %v652 = vpack.c.bf16 %v620, %v619
        %v653 = vunpack.c.l.bf16 %v621
        %v654 = vunpack.c.h.bf16 %v621
        %v655 = vunpack.c.l.bf16 %v622
        %v656 = vunpack.c.h.bf16 %v622
        %v657 = vunpack.c.l.bf16 %v623
        %v658 = vunpack.c.h.bf16 %v623
        %v659 = vunpack.c.l.bf16 %v624
        %v660 = vunpack.c.h.bf16 %v624
        %v661 = vunpack.c.l.bf16 %v625
        %v662 = vunpack.c.h.bf16 %v625
        %v663 = vunpack.c.l.bf16 %v626
        %v664 = vunpack.c.h.bf16 %v626
        %v665 = vunpack.c.l.bf16 %v627
        %v666 = vunpack.c.h.bf16 %v627
        %v667 = vunpack.c.l.bf16 %v628
        %v668 = vunpack.c.h.bf16 %v628
        %v669 = vunpack.c.l.bf16 %v629
        %v670 = vunpack.c.h.bf16 %v629
        %v671 = vunpack.c.l.bf16 %v630
        %v672 = vunpack.c.h.bf16 %v630
        %v673 = vunpack.c.l.bf16 %v631
        %v674 = vunpack.c.h.bf16 %v631
        %v675 = vunpack.c.l.bf16 %v632
        %v676 = vunpack.c.h.bf16 %v632
        %v677 = vunpack.c.l.bf16 %v633
        %v678 = vunpack.c.h.bf16 %v633
        %v679 = vunpack.c.l.bf16 %v634
        %v680 = vunpack.c.h.bf16 %v634
        %v681 = vunpack.c.l.bf16 %v635
        %v682 = vunpack.c.h.bf16 %v635
        %v683 = vunpack.c.l.bf16 %v636
        %v684 = vunpack.c.h.bf16 %v636
        %v685 = vunpack.c.l.bf16 %v637
        %v686 = vunpack.c.h.bf16 %v637
        %v687 = vunpack.c.l.bf16 %v638
        %v688 = vunpack.c.h.bf16 %v638
        %v689 = vunpack.c.l.bf16 %v639
        %v690 = vunpack.c.h.bf16 %v639
        %v691 = vunpack.c.l.bf16 %v640
        %v692 = vunpack.c.h.bf16 %v640
        %v693 = vunpack.c.l.bf16 %v641
        %v694 = vunpack.c.h.bf16 %v641
        %v695 = vunpack.c.l.bf16 %v642
        %v696 = vunpack.c.h.bf16 %v642
        %v697 = vunpack.c.l.bf16 %v643
        %v698 = vunpack.c.h.bf16 %v643
        %v699 = vunpack.c.l.bf16 %v644
        %v700 = vunpack.c.h.bf16 %v644
        %v701 = vunpack.c.l.bf16 %v645
        %v702 = vunpack.c.h.bf16 %v645
        %v703 = vunpack.c.l.bf16 %v646
        %v704 = vunpack.c.h.bf16 %v646
        %v705 = vunpack.c.l.bf16 %v647
        %v706 = vunpack.c.h.bf16 %v647
        %v707 = vunpack.c.l.bf16 %v648
        %v708 = vunpack.c.h.bf16 %v648
        %v709 = vunpack.c.l.bf16 %v649
        %v710 = vunpack.c.h.bf16 %v649
        %v711 = vunpack.c.l.bf16 %v650
        %v712 = vunpack.c.h.bf16 %v650
        %v713 = vunpack.c.l.bf16 %v651
        %v714 = vunpack.c.h.bf16 %v651
        %v715 = vunpack.c.l.bf16 %v652
        %v716 = vunpack.c.h.bf16 %v652
        %v717 = vmul.f32 %v653, %v685
        %v718 = vmul.f32 %v654, %v686
        %v719 = vmul.f32 %v655, %v687
        %v720 = vmul.f32 %v656, %v688
        %v721 = vmul.f32 %v657, %v689
        %v722 = vmul.f32 %v658, %v690
        %v723 = vmul.f32 %v659, %v691
        %v724 = vmul.f32 %v660, %v692
        %v725 = vmul.f32 %v661, %v693
        %v726 = vmul.f32 %v662, %v694
        %v727 = vmul.f32 %v663, %v695
        %v728 = vmul.f32 %v664, %v696
        %v729 = vmul.f32 %v665, %v697
        %v730 = vmul.f32 %v666, %v698
        %v731 = vmul.f32 %v667, %v699
        %v732 = vmul.f32 %v668, %v700
        %v733 = vmul.f32 %v669, %v701
        %v734 = vmul.f32 %v670, %v702
        %v735 = vmul.f32 %v671, %v703
        %v736 = vmul.f32 %v672, %v704
        %v737 = vmul.f32 %v673, %v705
        %v738 = vmul.f32 %v674, %v706
        %v739 = vmul.f32 %v675, %v707
        %v740 = vmul.f32 %v676, %v708
        %v741 = vmul.f32 %v677, %v709
        %v742 = vmul.f32 %v678, %v710
        %v743 = vmul.f32 %v679, %v711
        %v744 = vmul.f32 %v680, %v712
        %v745 = vmul.f32 %v681, %v713
        %v746 = vmul.f32 %v682, %v714
        %v747 = vmul.f32 %v683, %v715
        %v748 = vmul.f32 %v684, %v716
        %v749 = vpack.c.bf16 %v719, %v717
        %v750 = vpack.c.bf16 %v720, %v718
        %v751 = vpack.c.bf16 %v723, %v721
        %v752 = vpack.c.bf16 %v724, %v722
        %v753 = vpack.c.bf16 %v727, %v725
        %v754 = vpack.c.bf16 %v728, %v726
        %v755 = vpack.c.bf16 %v731, %v729
        %v756 = vpack.c.bf16 %v732, %v730
        %v757 = vpack.c.bf16 %v735, %v733
        %v758 = vpack.c.bf16 %v736, %v734
        %v759 = vpack.c.bf16 %v739, %v737
        %v760 = vpack.c.bf16 %v740, %v738
        %v761 = vpack.c.bf16 %v743, %v741
        %v762 = vpack.c.bf16 %v744, %v742
        %v763 = vpack.c.bf16 %v747, %v745
        %v764 = vpack.c.bf16 %v748, %v746
        %v765 = vld [vmem:[%s350] sm:$0xff]
        %v766 = vld [vmem:[%s350 + $0x8] sm:$0xff]
        %v767 = vld [vmem:[%s350 + $0x10] sm:$0xff]
        %v768 = vld [vmem:[%s350 + $0x18] sm:$0xff]
        %v769 = vld [vmem:[%s350 + $0x20] sm:$0xff]
        %v770 = vld [vmem:[%s350 + $0x28] sm:$0xff]
        %v771 = vld [vmem:[%s350 + $0x30] sm:$0xff]
        %v772 = vld [vmem:[%s350 + $0x38] sm:$0xff]
        %v773 = vld [vmem:[%s350 + $0x40] sm:$0xff]
        %v774 = vld [vmem:[%s350 + $0x48] sm:$0xff]
        %v775 = vld [vmem:[%s350 + $0x50] sm:$0xff]
        %v776 = vld [vmem:[%s350 + $0x58] sm:$0xff]
        %v777 = vld [vmem:[%s350 + $0x60] sm:$0xff]
        %v778 = vld [vmem:[%s350 + $0x68] sm:$0xff]
        %v779 = vld [vmem:[%s350 + $0x70] sm:$0xff]
        %v780 = vld [vmem:[%s350 + $0x78] sm:$0xff]
        %v781 = vld [vmem:[%s344] sm:$0xf]
        %v782 = vld [vmem:[%s344 + $0x4] sm:$0xf]
        %v783 = vld [vmem:[%s344 + $0x8] sm:$0xf]
        %v784 = vld [vmem:[%s344 + $0xc] sm:$0xf]
        %v785 = vld [vmem:[%s344 + $0x10] sm:$0xf]
        %v786 = vld [vmem:[%s344 + $0x14] sm:$0xf]
        %v787 = vld [vmem:[%s344 + $0x18] sm:$0xf]
        %v788 = vld [vmem:[%s344 + $0x1c] sm:$0xf]
        %v789 = vld [vmem:[%s344 + $0x20] sm:$0xf]
        %v790 = vld [vmem:[%s344 + $0x24] sm:$0xf]
        %v791 = vld [vmem:[%s344 + $0x28] sm:$0xf]
        %v792 = vld [vmem:[%s344 + $0x2c] sm:$0xf]
        %v793 = vld [vmem:[%s344 + $0x30] sm:$0xf]
        %v794 = vld [vmem:[%s344 + $0x34] sm:$0xf]
        %v795 = vld [vmem:[%s344 + $0x38] sm:$0xf]
        %v796 = vld [vmem:[%s344 + $0x3c] sm:$0xf]
        %v797 = vld [vmem:[%s344 + $0x40] sm:$0xf]
        %v798 = vld [vmem:[%s344 + $0x44] sm:$0xf]
        %v799 = vld [vmem:[%s344 + $0x48] sm:$0xf]
        %v800 = vld [vmem:[%s344 + $0x4c] sm:$0xf]
        %v801 = vld [vmem:[%s344 + $0x50] sm:$0xf]
        %v802 = vld [vmem:[%s344 + $0x54] sm:$0xf]
        %v803 = vld [vmem:[%s344 + $0x58] sm:$0xf]
        %v804 = vld [vmem:[%s344 + $0x5c] sm:$0xf]
        %v805 = vld [vmem:[%s344 + $0x60] sm:$0xf]
        %v806 = vld [vmem:[%s344 + $0x64] sm:$0xf]
        %v807 = vld [vmem:[%s344 + $0x68] sm:$0xf]
        %v808 = vld [vmem:[%s344 + $0x6c] sm:$0xf]
        %v809 = vld [vmem:[%s344 + $0x70] sm:$0xf]
        %v810 = vld [vmem:[%s344 + $0x74] sm:$0xf]
        %v811 = vld [vmem:[%s344 + $0x78] sm:$0xf]
        %v812 = vld [vmem:[%s344 + $0x7c] sm:$0xf]
        %v845 = vunpack.c.l.b16 %v781
        %v846 = vunpack.c.l.b16 %v782
        %v847 = vunpack.c.l.b16 %v783
        %v848 = vunpack.c.l.b16 %v784
        %v849 = vunpack.c.l.b16 %v785
        %v850 = vunpack.c.l.b16 %v786
        %v851 = vunpack.c.l.b16 %v787
        %v852 = vunpack.c.l.b16 %v788
        %v853 = vunpack.c.l.b16 %v789
        %v854 = vunpack.c.l.b16 %v790
        %v855 = vunpack.c.l.b16 %v791
        %v856 = vunpack.c.l.b16 %v792
        %v857 = vunpack.c.l.b16 %v793
        %v858 = vunpack.c.l.b16 %v794
        %v859 = vunpack.c.l.b16 %v795
        %v860 = vunpack.c.l.b16 %v796
        %v861 = vunpack.c.l.b16 %v797
        %v862 = vunpack.c.l.b16 %v798
        %v863 = vunpack.c.l.b16 %v799
        %v864 = vunpack.c.l.b16 %v800
        %v865 = vunpack.c.l.b16 %v801
        %v866 = vunpack.c.l.b16 %v802
        %v867 = vunpack.c.l.b16 %v803
        %v868 = vunpack.c.l.b16 %v804
        %v869 = vunpack.c.l.b16 %v805
        %v870 = vunpack.c.l.b16 %v806
        %v871 = vunpack.c.l.b16 %v807
        %v872 = vunpack.c.l.b16 %v808
        %v873 = vunpack.c.l.b16 %v809
        %v874 = vunpack.c.l.b16 %v810
        %v875 = vunpack.c.l.b16 %v811
        %v876 = vunpack.c.l.b16 %v812
        %v877 = vpack.c.b16 %v846, %v845
        %v878 = vpack.c.b16 %v848, %v847
        %v879 = vpack.c.b16 %v850, %v849
        %v880 = vpack.c.b16 %v852, %v851
        %v881 = vpack.c.b16 %v854, %v853
        %v882 = vpack.c.b16 %v856, %v855
        %v883 = vpack.c.b16 %v858, %v857
        %v884 = vpack.c.b16 %v860, %v859
        %v885 = vpack.c.b16 %v862, %v861
        %v886 = vpack.c.b16 %v864, %v863
        %v887 = vpack.c.b16 %v866, %v865
        %v888 = vpack.c.b16 %v868, %v867
        %v889 = vpack.c.b16 %v870, %v869
        %v890 = vpack.c.b16 %v872, %v871
        %v891 = vpack.c.b16 %v874, %v873
        %v892 = vpack.c.b16 %v876, %v875
        %909 = vmatpush.bf16.msra.mxu0 %v884
        %910 = vmatpush.bf16.msra.mxu0 %v883
        %911 = vmatpush.bf16.msra.mxu0 %v882
        %912 = vmatpush.bf16.msra.mxu0 %v881
        %913 = vmatpush.bf16.msra.mxu0 %v880
        %914 = vmatpush.bf16.msra.mxu0 %v879
        %915 = vmatpush.bf16.msra.mxu0 %v878
        %916 = vmatpush.bf16.msra.mxu0 %v877
        %917 = vmatmul.bf16.gmra.mxu0 %v749
        %v918 = vpop.f32.mrf.mxu0
        %v919 = vadd.f32 0.0, %v918
        %v920 = vpop.f32.mrf.mxu0
        %v921 = vadd.f32 0.0, %v920
        %922 = vmatmul.bf16.gmra.mxu0 %v751
        %v923 = vpop.f32.mrf.mxu0
        %v924 = vadd.f32 0.0, %v923
        %v925 = vpop.f32.mrf.mxu0
        %v926 = vadd.f32 0.0, %v925
        %927 = vmatmul.bf16.gmra.mxu0 %v753
        %v928 = vpop.f32.mrf.mxu0
        %v929 = vadd.f32 0.0, %v928
        %v930 = vpop.f32.mrf.mxu0
        %v931 = vadd.f32 0.0, %v930
        %932 = vmatmul.bf16.gmra.mxu0 %v755
        %v933 = vpop.f32.mrf.mxu0
        %v934 = vadd.f32 0.0, %v933
        %v935 = vpop.f32.mrf.mxu0
        %v936 = vadd.f32 0.0, %v935
        %937 = vmatmul.bf16.gmra.mxu0 %v757
        %v938 = vpop.f32.mrf.mxu0
        %v939 = vadd.f32 0.0, %v938
        %v940 = vpop.f32.mrf.mxu0
        %v941 = vadd.f32 0.0, %v940
        %942 = vmatmul.bf16.gmra.mxu0 %v759
        %v943 = vpop.f32.mrf.mxu0
        %v944 = vadd.f32 0.0, %v943
        %v945 = vpop.f32.mrf.mxu0
        %v946 = vadd.f32 0.0, %v945
        %947 = vmatmul.bf16.gmra.mxu0 %v761
        %v948 = vpop.f32.mrf.mxu0
        %v949 = vadd.f32 0.0, %v948
        %v950 = vpop.f32.mrf.mxu0
        %v951 = vadd.f32 0.0, %v950
        %952 = vmatmul.bf16.gmra.mxu0 %v763
        %v953 = vpop.f32.mrf.mxu0
        %v954 = vadd.f32 0.0, %v953
        %v955 = vpop.f32.mrf.mxu0
        %v956 = vadd.f32 0.0, %v955
        %957 = vdwg.mxu0
        %958 = vmatpush.bf16.msra.mxu0 %v892
        %959 = vmatpush.bf16.msra.mxu0 %v891
        %960 = vmatpush.bf16.msra.mxu0 %v890
        %961 = vmatpush.bf16.msra.mxu0 %v889
        %962 = vmatpush.bf16.msra.mxu0 %v888
        %963 = vmatpush.bf16.msra.mxu0 %v887
        %964 = vmatpush.bf16.msra.mxu0 %v886
        %965 = vmatpush.bf16.msra.mxu0 %v885
        %966 = vmatmul.bf16.gmra.mxu0 %v750
        %v967 = vpop.f32.mrf.mxu0
        %v968 = vadd.f32 %v919, %v967
        %v969 = vpop.f32.mrf.mxu0
        %v970 = vadd.f32 %v921, %v969
        %971 = vmatmul.bf16.gmra.mxu0 %v752
        %v972 = vpop.f32.mrf.mxu0
        %v973 = vadd.f32 %v924, %v972
        %v974 = vpop.f32.mrf.mxu0
        %v975 = vadd.f32 %v926, %v974
        %976 = vmatmul.bf16.gmra.mxu0 %v754
        %v977 = vpop.f32.mrf.mxu0
        %v978 = vadd.f32 %v929, %v977
        %v979 = vpop.f32.mrf.mxu0
        %v980 = vadd.f32 %v931, %v979
        %981 = vmatmul.bf16.gmra.mxu0 %v756
        %v982 = vpop.f32.mrf.mxu0
        %v983 = vadd.f32 %v934, %v982
        %v984 = vpop.f32.mrf.mxu0
        %v985 = vadd.f32 %v936, %v984
        %986 = vmatmul.bf16.gmra.mxu0 %v758
        %v987 = vpop.f32.mrf.mxu0
        %v988 = vadd.f32 %v939, %v987
        %v989 = vpop.f32.mrf.mxu0
        %v990 = vadd.f32 %v941, %v989
        %991 = vmatmul.bf16.gmra.mxu0 %v760
        %v992 = vpop.f32.mrf.mxu0
        %v993 = vadd.f32 %v944, %v992
        %v994 = vpop.f32.mrf.mxu0
        %v995 = vadd.f32 %v946, %v994
        %996 = vmatmul.bf16.gmra.mxu0 %v762
        %v997 = vpop.f32.mrf.mxu0
        %v998 = vadd.f32 %v949, %v997
        %v999 = vpop.f32.mrf.mxu0
        %v1000 = vadd.f32 %v951, %v999
        %1001 = vmatmul.bf16.gmra.mxu0 %v764
        %v1002 = vpop.f32.mrf.mxu0
        %v1003 = vadd.f32 %v954, %v1002
        %v1004 = vpop.f32.mrf.mxu0
        %v1005 = vadd.f32 %v956, %v1004
        %1006 = vdwg.mxu0
        %v1007 = vadd.f32 %v765, %v968
        %v1008 = vadd.f32 %v766, %v970
        %v1009 = vadd.f32 %v767, %v973
        %v1010 = vadd.f32 %v768, %v975
        %v1011 = vadd.f32 %v769, %v978
        %v1012 = vadd.f32 %v770, %v980
        %v1013 = vadd.f32 %v771, %v983
        %v1014 = vadd.f32 %v772, %v985
        %v1015 = vadd.f32 %v773, %v988
        %v1016 = vadd.f32 %v774, %v990
        %v1017 = vadd.f32 %v775, %v993
        %v1018 = vadd.f32 %v776, %v995
        %v1019 = vadd.f32 %v777, %v998
        %v1020 = vadd.f32 %v778, %v1000
        %v1021 = vadd.f32 %v779, %v1003
        %v1022 = vadd.f32 %v780, %v1005
        %vm1023 = vcmask 261120
        %1024 = vst.msk [vmem:[%s350] sm:$0xff] %vm1023, %v1007
        %1025 = vst.msk [vmem:[%s350 + $0x8] sm:$0xff] %vm1023, %v1008
        %1026 = vst.msk [vmem:[%s350 + $0x10] sm:$0xff] %vm1023, %v1009
        %1027 = vst.msk [vmem:[%s350 + $0x18] sm:$0xff] %vm1023, %v1010
        %1028 = vst.msk [vmem:[%s350 + $0x20] sm:$0xff] %vm1023, %v1011
        %1029 = vst.msk [vmem:[%s350 + $0x28] sm:$0xff] %vm1023, %v1012
        %1030 = vst.msk [vmem:[%s350 + $0x30] sm:$0xff] %vm1023, %v1013
        %1031 = vst.msk [vmem:[%s350 + $0x38] sm:$0xff] %vm1023, %v1014
        %1032 = vst.msk [vmem:[%s350 + $0x40] sm:$0xff] %vm1023, %v1015
        %1033 = vst.msk [vmem:[%s350 + $0x48] sm:$0xff] %vm1023, %v1016
        %1034 = vst.msk [vmem:[%s350 + $0x50] sm:$0xff] %vm1023, %v1017
        %1035 = vst.msk [vmem:[%s350 + $0x58] sm:$0xff] %vm1023, %v1018
        %1036 = vst.msk [vmem:[%s350 + $0x60] sm:$0xff] %vm1023, %v1019
        %1037 = vst.msk [vmem:[%s350 + $0x68] sm:$0xff] %vm1023, %v1020
        %1038 = vst.msk [vmem:[%s350 + $0x70] sm:$0xff] %vm1023, %v1021
        %1039 = vst.msk [vmem:[%s350 + $0x78] sm:$0xff] %vm1023, %v1022
        %s1040 = smul.u32 16, %s27
        %p1041 = scmp.lt.s32.totalorder %s1040, 31
        %s1042 = scalar_select %p1041, %s1040, 31
        %s1043 = smul.addr %s1042, 8
        %s1044 = scalar_lea.vmem %s5, %s1043
        // Predicated region
        $region57: #{tpu_custom_call.1} parent=39 // pred_check
          %p1045 = pneg %p177
        $region58: #{tpu_custom_call.1} parent=39 // pred_check_branch
          %1047 = sbr.rel (%p1045) target = $region60
        $region59: #{tpu_custom_call.1} parent=39 // pred_region
          %s1048 = smul.u32 16, %s27
        $region60: #{tpu_custom_call.1} parent=39 // pred_fallthru
          _
      $region40: #{tpu_custom_call.1} parent=5 // pred_fallthru
        _
      %p1049 = scmp.le.s32.totalorder 2, %s18
      // Predicated region
      $region61: #{tpu_custom_call.1} parent=5 // pred_check
        %p1050 = pneg %p1049
      $region62: #{tpu_custom_call.1} parent=5 // pred_check_branch
        %1052 = sbr.rel (%p1050) target = $region64
      $region63: #{tpu_custom_call.1} parent=5 // pred_region
        %s1053 = ssub.s32 %s18, 2
        // Predicated region
        $region65: #{tpu_custom_call.1} parent=63 // pred_check
          %p1054 = pneg %p183
        $region66: #{tpu_custom_call.1} parent=63 // pred_check_branch
          %1056 = sbr.rel (%p1054) target = $region68
        $region67: #{tpu_custom_call.1} parent=63 // pred_region
          %s1057 = smul.u32 16, %s29
          %p1058 = scmp.lt.s32.totalorder %s1057, 31
          %s1059 = scalar_select %p1058, %s1057, 31
          %s1060 = smul.addr %s1059, 8
          %s1061 = scalar_lea.vmem %s5, %s1060
        $region68: #{tpu_custom_call.1} parent=63 // pred_fallthru
          _
      $region64: #{tpu_custom_call.1} parent=5 // pred_fallthru
        _
    $region6: #{tpu_custom_call.1} parent=1 // loop_footer
      %s22 = sadd.s32 1, %s18
    $region7: #{tpu_custom_call.1} parent=1 // loop_footer_branch
      %17 = sbr.rel target = $region3
    $region8: #{tpu_custom_call.1} parent=1 // loop_exit
      _
    %1062 = vsyncpa [#allocation3], 1
    %s1063 = scalar_lea.sflag [#allocation3], 1
    %1064 = vsyncpa %s1063, 1
    %1065 = vsyncpa [#allocation7], 1
    %s1066 = scalar_lea.sflag [#allocation7], 1
    %1067 = vsyncpa %s1066, 1
    %1068 = vsyncpa [#allocation4], 1
    %s1069 = scalar_lea.sflag [#allocation4], 1
    %1070 = vsyncpa %s1069, 1

</llo_original>
